<compile_context>
chip_gen: v7x
topology: tpu7x:2x2x1
jax: 0.10.0
libtpu: 0.0.40
codegen_flags: <defaults>
</compile_context>

<pallas_src>
import functools

import jax
import jax.numpy as jnp
from jax import lax
from jax.experimental import pallas as pl
from jax.experimental.pallas import tpu as pltpu

_SQRT_HALF = 0.7071067811865476


def _round_up(x, m):
    return ((x + m - 1) // m) * m


def _cdiv(a, b):
    return (a + b - 1) // b


def _layer_norm_f32(x_ref, gamma_ref, beta_ref, eps):
    x = x_ref[...].astype(jnp.float32)
    mean = jnp.mean(x, axis=-1, keepdims=True)
    xc = x - mean
    var = jnp.mean(xc * xc, axis=-1, keepdims=True)
    xn = xc * lax.rsqrt(var + eps)
    return xn * gamma_ref[...].astype(jnp.float32) + beta_ref[...].astype(jnp.float32)


def _gelu_exact(h):
    # Exact GELU (erf formulation; matches PyTorch nn.GELU default).  erf uses the EUP slot.
    return 0.5 * h * (1.0 + lax.erf(h * jnp.float32(_SQRT_HALF)))


def _mlp_fused_kernel(x_ref, gamma_ref, beta_ref, w1_ref, b1_ref, w2_ref, b2_ref,
                      o_ref, *, eps):
    """Hidden dim resident: LN -> Linear -> GELU -> Linear, one row tile per grid step."""
    xn = _layer_norm_f32(x_ref, gamma_ref, beta_ref, eps)
    h = jnp.dot(xn.astype(w1_ref.dtype), w1_ref[...], preferred_element_type=jnp.float32)
    h = _gelu_exact(h + b1_ref[...].astype(jnp.float32))
    # Dropout(p): identity in inference mode.
    # TODO(synk): training-mode dropout (pltpu.prng_* masking) not implemented.
    out = jnp.dot(h.astype(w2_ref.dtype), w2_ref[...], preferred_element_type=jnp.float32)
    o_ref[...] = (out + b2_ref[...].astype(jnp.float32)).astype(o_ref.dtype)


def _mlp_htiled_kernel(x_ref, gamma_ref, beta_ref, w1_ref, b1_ref, w2_ref, b2_ref,
                       o_ref, xn_ref, acc_ref, *, eps):
    """Hidden dim tiled: accumulate partial products of the 2nd matmul over hidden tiles."""
    h_idx = pl.program_id(1)

    @pl.when(h_idx == 0)
    def _():
        xn = _layer_norm_f32(x_ref, gamma_ref, beta_ref, eps)
        xn_ref[...] = xn.astype(xn_ref.dtype)   # matmul operand in the weights' dtype
        acc_ref[...] = jnp.zeros_like(acc_ref)

    h = jnp.dot(xn_ref[...], w1_ref[...], preferred_element_type=jnp.float32)
    h = _gelu_exact(h + b1_ref[...].astype(jnp.float32))
    # Dropout(p): identity in inference mode.
    acc_ref[...] += jnp.dot(h.astype(w2_ref.dtype), w2_ref[...],
                            preferred_element_type=jnp.float32)

    @pl.when(h_idx == pl.num_programs(1) - 1)
    def _():
        o_ref[...] = (acc_ref[...] + b2_ref[...].astype(jnp.float32)).astype(o_ref.dtype)


def mlp_block(x, gamma, beta, w1, b1, w2, b2, *,
              eps=1e-5, row_tile=512, hidden_tile=None):
    """x: (..., E) -> (..., E). gamma/beta: (E,), w1: (E, H), b1: (H,), w2: (H, E), b2: (E,)."""
    orig_shape = x.shape
    E = x.shape[-1]
    M = 1
    for d in x.shape[:-1]:
        M *= int(d)
    H = w1.shape[1]
    assert w1.shape == (E, H) and w2.shape == (H, E)
    assert gamma.shape == (E,) and beta.shape == (E,)
    assert b1.shape == (H,) and b2.shape == (E,)

    x2 = x.reshape(M, E)
    gamma2, beta2 = gamma.reshape(1, E), beta.reshape(1, E)
    b1_2, b2_2 = b1.reshape(1, H), b2.reshape(1, E)

    x_bytes = jnp.dtype(x.dtype).itemsize
    w_bytes = jnp.dtype(w1.dtype).itemsize

    # ---- row tiling: large, granule-aligned tiles; ragged last block is masked by Mosaic ----
    granule = max(32 // x_bytes, 32 // w_bytes, 8)   # sublane packing: 8 (f32), 16 (bf16), 32 (i8)
    row_tile = max(int(row_tile), granule)
    M_eff = M
    if M < granule:
        # Degenerate tiny-M case only: pad a handful of rows so the block fits the sublane granule.
        x2 = jnp.pad(x2, ((0, granule - M), (0, 0)))
        M_eff = granule
        tm = granule
    elif M >= row_tile:
        tm = (row_tile // granule) * granule
    else:
        tm = (M // granule) * granule
    num_m = _cdiv(M_eff, tm)

    # ---- optional hidden-dim tiling (last resort: it re-streams the weights per row tile) ----
    if hidden_tile is None or int(hidden_tile) >= H:
        th = H
    else:
        th = (min(int(hidden_tile), H) // 128) * 128
        while th >= 128 and H % th != 0:   # largest multiple-of-128 divisor of H <= hidden_tile
            th -= 128
        if th < 128:
            th = H
    num_h = H // th

    # ---- VMEM budget: actual footprint with ~1.5x headroom, never claim a full 64 MiB core ----
    est = (2 * tm * E * x_bytes                                     # x (double-buffered)
           + 2 * tm * E * x_bytes                                   # out (double-buffered)
           + (1 if num_h == 1 else 2) * 2 * E * th * w_bytes        # w1 + w2
           + 2 * (th + 3 * E) * w_bytes                             # biases + LN params
           + tm * th * 4                                            # f32 GELU temporary
           + tm * E * 4)                                            # f32 2nd-matmul result
    if num_h > 1:
        est += tm * E * (w_bytes + 4)                               # xn + acc scratch
    vmem_limit = int(min(56 * 1024 * 1024, max(3 * est // 2, 16 * 1024 * 1024)))

    weight_passes = 1 if num_h == 1 else num_m
    cost = pl.CostEstimate(
        flops=4 * M * E * H + 10 * M * E,
        transcendentals=M * H + M,
        bytes_accessed=(2 * M * E * x_bytes
                        + 2 * E * H * w_bytes * weight_passes
                        + (3 * E + H) * w_bytes),
    )

    if num_h == 1:
        grid = (num_m,)
        in_specs = [
            pl.BlockSpec((tm, E), lambda i: (i, 0)),      # x rows
            pl.BlockSpec((1, E), lambda i: (0, 0)),       # gamma (fetched once)
            pl.BlockSpec((1, E), lambda i: (0, 0)),       # beta
            pl.BlockSpec((E, H), lambda i: (0, 0)),       # w1
            pl.BlockSpec((1, H), lambda i: (0, 0)),       # b1
            pl.BlockSpec((H, E), lambda i: (0, 0)),       # w2
            pl.BlockSpec((1, E), lambda i: (0, 0)),       # b2
        ]
        out_specs = pl.BlockSpec((tm, E), lambda i: (i, 0))
        kernel = functools.partial(_mlp_fused_kernel, eps=eps)
        scratch_shapes = ()
        dim_sem = ("parallel",)
    else:
        grid = (num_m, num_h)
        in_specs = [
            pl.BlockSpec((tm, E), lambda i, h: (i, 0)),   # x rows
            pl.BlockSpec((1, E), lambda i, h: (0, 0)),    # gamma
            pl.BlockSpec((1, E), lambda i, h: (0, 0)),    # beta
            pl.BlockSpec((E, th), lambda i, h: (0, h)),   # w1 (streamed over hidden tiles)
            pl.BlockSpec((1, th), lambda i, h: (0, h)),   # b1
            pl.BlockSpec((th, E), lambda i, h: (h, 0)),   # w2
            pl.BlockSpec((1, E), lambda i, h: (0, 0)),    # b2
        ]
        out_specs = pl.BlockSpec((tm, E), lambda i, h: (i, 0))
        kernel = functools.partial(_mlp_htiled_kernel, eps=eps)
        scratch_shapes = (
            pltpu.VMEM((tm, E), w1.dtype),     # post-LayerNorm rows (matmul operand dtype)
            pltpu.VMEM((tm, E), jnp.float32),  # f32 accumulator for the 2nd matmul
        )
        dim_sem = ("parallel", "arbitrary")

    out2 = pl.pallas_call(
        kernel,
        out_shape=jax.ShapeDtypeStruct((M_eff, E), x.dtype),
        grid_spec=pltpu.PrefetchScalarGridSpec(
            num_scalar_prefetch=0,
            grid=grid,
            in_specs=in_specs,
            out_specs=out_specs,
            scratch_shapes=scratch_shapes,
        ),
        compiler_params=pltpu.CompilerParams(
            dimension_semantics=dim_sem,
            vmem_limit_bytes=vmem_limit,
        ),
        cost_estimate=cost,
    )(x2, gamma2, beta2, w1, b1_2, w2, b2_2)

    if M_eff != M:
        out2 = out2[:M]
    return out2.reshape(orig_shape)


def _reference(x, gamma, beta, w1, b1, w2, b2, eps=1e-5):
    x = x.astype(jnp.float32)
    mean = jnp.mean(x, axis=-1, keepdims=True)
    var = jnp.mean((x - mean) ** 2, axis=-1, keepdims=True)
    xn = (x - mean) / jnp.sqrt(var + eps) * gamma.astype(jnp.float32) + beta.astype(jnp.float32)
    h = jnp.dot(xn, w1.astype(jnp.float32), precision=lax.Precision.HIGHEST)
    h = h + b1.astype(jnp.float32)
    h = 0.5 * h * (1.0 + lax.erf(h * jnp.float32(_SQRT_HALF)))
    out = jnp.dot(h, w2.astype(jnp.float32), precision=lax.Precision.HIGHEST)
    return out + b2.astype(jnp.float32)


if __name__ == "__main__":
    # Small shapes consistent with the module: (batch, seq, embedding_dim).
    B, S, E, H = 2, 8, 128, 256   # scaled-down embedding_dim=768 / mlp_size=3072

    key = jax.random.PRNGKey(0)
    kx, k1, k2, k3, k4, k5, k6 = jax.random.split(key, 7)

    x = jax.random.normal(kx, (B, S, E), dtype=jnp.float32)
    gamma = 1.0 + 0.1 * jax.random.normal(k5, (E,), dtype=jnp.float32)
    beta = 0.1 * jax.random.normal(k6, (E,), dtype=jnp.float32)
    w1 = jax.random.normal(k1, (E, H), dtype=jnp.float32) * 0.02
    b1 = jax.random.normal(k2, (H,), dtype=jnp.float32) * 0.02
    w2 = jax.random.normal(k3, (H, E), dtype=jnp.float32) * 0.02
    b2 = jax.random.normal(k4, (E,), dtype=jnp.float32) * 0.02

    ref = _reference(x, gamma, beta, w1, b1, w2, b2)

    # 1) f32, fused fast path (hidden dim resident).
    out = jax.block_until_ready(mlp_block(x, gamma, beta, w1, b1, w2, b2))
    assert out.shape == (B, S, E)
    assert jnp.allclose(out, ref, atol=2e-3, rtol=2e-2), "f32 fused path mismatch vs reference"

    # 2) f32 with the hidden dim tiled (exercises the f32 accumulator / reduction axis).
    out_t = jax.block_until_ready(
        mlp_block(x, gamma, beta, w1, b1, w2, b2, hidden_tile=128))
    assert jnp.allclose(out_t, ref, atol=2e-3, rtol=2e-2), "hidden-tiled mismatch vs reference"

    # 3) ragged row count (M=14 not a multiple of the row tile): masked last block, no padding.
    xr = x[:, :7, :]
    ref_r = _reference(xr, gamma, beta, w1, b1, w2, b2)
    out_r = jax.block_until_ready(
        mlp_block(xr, gamma, beta, w1, b1, w2, b2, row_tile=8))
    assert out_r.shape == xr.shape
    assert jnp.allclose(out_r, ref_r, atol=2e-3, rtol=2e-2), "ragged-row mismatch vs reference"

    # 4) bf16 operands (native MXU dtype, f32 accumulation), checked loosely vs f32 reference.
    bf = jnp.bfloat16
    out_bf = jax.block_until_ready(
        mlp_block(x.astype(bf), gamma.astype(bf), beta.astype(bf),
                  w1.astype(bf), b1.astype(bf), w2.astype(bf), b2.astype(bf)))
    assert jnp.allclose(out_bf.astype(jnp.float32), ref, atol=5e-2, rtol=5e-2), \
        "bf16 mismatch vs reference"

    print("KERNEL_OK")
</pallas_src>

<mosaic_0001>
module attributes {stable_mosaic.version = 11 : i64} {
  func.func @_mlp_fused_kernel(%arg0: i32, %arg1: memref<16x128xf32, #tpu.memory_space<vmem>>, %arg2: memref<1x128xf32, #tpu.memory_space<vmem>>, %arg3: memref<1x128xf32, #tpu.memory_space<vmem>>, %arg4: memref<128x256xf32, #tpu.memory_space<vmem>>, %arg5: memref<1x256xf32, #tpu.memory_space<vmem>>, %arg6: memref<256x128xf32, #tpu.memory_space<vmem>>, %arg7: memref<1x128xf32, #tpu.memory_space<vmem>>, %arg8: memref<16x128xf32, #tpu.memory_space<vmem>>) attributes {dimension_semantics = [#tpu.dimension_semantics<parallel>], iteration_bounds = array<i64: 1>, scalar_prefetch = 0 : i64, scratch_operands = 0 : i64, tpu.core_type = #tpu.core_type<tc>, window_params = [{transform_indices = @transform_0, window_bounds = array<i64: 16, 128>}, {pipeline_mode = #tpu.pipeline_mode<synchronous>, transform_indices = @transform_1, window_bounds = array<i64: 1, 128>}, {pipeline_mode = #tpu.pipeline_mode<synchronous>, transform_indices = @transform_2, window_bounds = array<i64: 1, 128>}, {pipeline_mode = #tpu.pipeline_mode<synchronous>, transform_indices = @transform_3, window_bounds = array<i64: 128, 256>}, {pipeline_mode = #tpu.pipeline_mode<synchronous>, transform_indices = @transform_4, window_bounds = array<i64: 1, 256>}, {pipeline_mode = #tpu.pipeline_mode<synchronous>, transform_indices = @transform_5, window_bounds = array<i64: 256, 128>}, {pipeline_mode = #tpu.pipeline_mode<synchronous>, transform_indices = @transform_6, window_bounds = array<i64: 1, 128>}, {transform_indices = @transform_7, window_bounds = array<i64: 16, 128>}]} {
    %c0 = arith.constant 0 : index
    %c0_0 = arith.constant 0 : index
    %0 = vector.load %arg1[%c0, %c0_0] : memref<16x128xf32, #tpu.memory_space<vmem>>, vector<16x128xf32>
    %cst = arith.constant dense<0.000000e+00> : vector<16xf32>
    %1 = vector.multi_reduction <add>, %0, %cst [1] : vector<16x128xf32> to vector<16xf32>
    %2 = vector.shape_cast %1 : vector<16xf32> to vector<16x1xf32>
    %cst_1 = arith.constant 1.280000e+02 : f32
    %3 = vector.broadcast %cst_1 : f32 to vector<16x1xf32>
    %4 = arith.divf %2, %3 : vector<16x1xf32>
    %5 = vector.broadcast %4 : vector<16x1xf32> to vector<16x128xf32>
    %6 = arith.subf %0, %5 : vector<16x128xf32>
    %7 = arith.mulf %6, %6 : vector<16x128xf32>
    %cst_2 = arith.constant dense<0.000000e+00> : vector<16xf32>
    %8 = vector.multi_reduction <add>, %7, %cst_2 [1] : vector<16x128xf32> to vector<16xf32>
    %9 = vector.shape_cast %8 : vector<16xf32> to vector<16x1xf32>
    %cst_3 = arith.constant 1.280000e+02 : f32
    %10 = vector.broadcast %cst_3 : f32 to vector<16x1xf32>
    %11 = arith.divf %9, %10 : vector<16x1xf32>
    %cst_4 = arith.constant 9.99999974E-6 : f32
    %12 = vector.broadcast %cst_4 : f32 to vector<16x1xf32>
    %13 = arith.addf %11, %12 : vector<16x1xf32>
    %14 = math.rsqrt %13 : vector<16x1xf32>
    %15 = vector.broadcast %14 : vector<16x1xf32> to vector<16x128xf32>
    %16 = arith.mulf %6, %15 : vector<16x128xf32>
    %c0_5 = arith.constant 0 : index
    %c0_6 = arith.constant 0 : index
    %17 = vector.load %arg2[%c0_5, %c0_6] : memref<1x128xf32, #tpu.memory_space<vmem>>, vector<1x128xf32>
    %18 = vector.broadcast %17 : vector<1x128xf32> to vector<16x128xf32>
    %19 = arith.mulf %16, %18 : vector<16x128xf32>
    %c0_7 = arith.constant 0 : index
    %c0_8 = arith.constant 0 : index
    %20 = vector.load %arg3[%c0_7, %c0_8] : memref<1x128xf32, #tpu.memory_space<vmem>>, vector<1x128xf32>
    %21 = vector.broadcast %20 : vector<1x128xf32> to vector<16x128xf32>
    %22 = arith.addf %19, %21 : vector<16x128xf32>
    %c0_9 = arith.constant 0 : index
    %c0_10 = arith.constant 0 : index
    %23 = vector.load %arg4[%c0_9, %c0_10] : memref<128x256xf32, #tpu.memory_space<vmem>>, vector<128x256xf32>
    %cst_11 = arith.constant dense<0.000000e+00> : vector<16x256xf32>
    %24 = tpu.matmul %22, %23, %cst_11 {dimension_numbers = #tpu.dot_dimension_numbers<[1], [0], [0], [1], [0, 0, 1, 1], [], []>} : vector<16x128xf32>, vector<128x256xf32>, vector<16x256xf32> -> vector<16x256xf32>
    %c0_12 = arith.constant 0 : index
    %c0_13 = arith.constant 0 : index
    %25 = vector.load %arg5[%c0_12, %c0_13] : memref<1x256xf32, #tpu.memory_space<vmem>>, vector<1x256xf32>
    %26 = vector.broadcast %25 : vector<1x256xf32> to vector<16x256xf32>
    %27 = arith.addf %24, %26 : vector<16x256xf32>
    %cst_14 = arith.constant 5.000000e-01 : f32
    %28 = vector.broadcast %cst_14 : f32 to vector<16x256xf32>
    %29 = arith.mulf %28, %27 : vector<16x256xf32>
    %cst_15 = arith.constant 0.707106769 : f32
    %30 = vector.broadcast %cst_15 : f32 to vector<16x256xf32>
    %31 = arith.mulf %27, %30 : vector<16x256xf32>
    %32 = math.erf %31 : vector<16x256xf32>
    %cst_16 = arith.constant 1.000000e+00 : f32
    %33 = vector.broadcast %cst_16 : f32 to vector<16x256xf32>
    %34 = arith.addf %33, %32 : vector<16x256xf32>
    %35 = arith.mulf %29, %34 : vector<16x256xf32>
    %c0_17 = arith.constant 0 : index
    %c0_18 = arith.constant 0 : index
    %36 = vector.load %arg6[%c0_17, %c0_18] : memref<256x128xf32, #tpu.memory_space<vmem>>, vector<256x128xf32>
    %cst_19 = arith.constant dense<0.000000e+00> : vector<16x128xf32>
    %37 = tpu.matmul %35, %36, %cst_19 {dimension_numbers = #tpu.dot_dimension_numbers<[1], [0], [0], [1], [0, 0, 1, 1], [], []>} : vector<16x256xf32>, vector<256x128xf32>, vector<16x128xf32> -> vector<16x128xf32>
    %c0_20 = arith.constant 0 : index
    %c0_21 = arith.constant 0 : index
    %38 = vector.load %arg7[%c0_20, %c0_21] : memref<1x128xf32, #tpu.memory_space<vmem>>, vector<1x128xf32>
    %39 = vector.broadcast %38 : vector<1x128xf32> to vector<16x128xf32>
    %40 = arith.addf %37, %39 : vector<16x128xf32>
    %c0_22 = arith.constant 0 : index
    %c0_23 = arith.constant 0 : index
    %41 = vector.load %arg8[%c0_22, %c0_23] : memref<16x128xf32, #tpu.memory_space<vmem>>, vector<16x128xf32>
    tpu.vector_store %arg8[%c0_22, %c0_23], %40 {strides = array<i32>} : memref<16x128xf32, #tpu.memory_space<vmem>>, vector<16x128xf32>,
    return
  }
  func.func @transform_0(%arg0: i32) -> (i32, i32) {
    %c0_i32 = arith.constant 0 : i32
    %c0_i32_0 = arith.constant 0 : i32
    return %arg0, %c0_i32 : i32, i32
  }
  func.func @transform_1(%arg0: i32) -> (i32, i32) {
    %c0_i32 = arith.constant 0 : i32
    %c0_i32_0 = arith.constant 0 : i32
    %c0_i32_1 = arith.constant 0 : i32
    return %c0_i32, %c0_i32_0 : i32, i32
  }
  func.func @transform_2(%arg0: i32) -> (i32, i32) {
    %c0_i32 = arith.constant 0 : i32
    %c0_i32_0 = arith.constant 0 : i32
    %c0_i32_1 = arith.constant 0 : i32
    return %c0_i32, %c0_i32_0 : i32, i32
  }
  func.func @transform_3(%arg0: i32) -> (i32, i32) {
    %c0_i32 = arith.constant 0 : i32
    %c0_i32_0 = arith.constant 0 : i32
    %c0_i32_1 = arith.constant 0 : i32
    return %c0_i32, %c0_i32_0 : i32, i32
  }
  func.func @transform_4(%arg0: i32) -> (i32, i32) {
    %c0_i32 = arith.constant 0 : i32
    %c0_i32_0 = arith.constant 0 : i32
    %c0_i32_1 = arith.constant 0 : i32
    return %c0_i32, %c0_i32_0 : i32, i32
  }
  func.func @transform_5(%arg0: i32) -> (i32, i32) {
    %c0_i32 = arith.constant 0 : i32
    %c0_i32_0 = arith.constant 0 : i32
    %c0_i32_1 = arith.constant 0 : i32
    return %c0_i32, %c0_i32_0 : i32, i32
  }
  func.func @transform_6(%arg0: i32) -> (i32, i32) {
    %c0_i32 = arith.constant 0 : i32
    %c0_i32_0 = arith.constant 0 : i32
    %c0_i32_1 = arith.constant 0 : i32
    return %c0_i32, %c0_i32_0 : i32, i32
  }
  func.func @transform_7(%arg0: i32) -> (i32, i32) {
    %c0_i32 = arith.constant 0 : i32
    %c0_i32_0 = arith.constant 0 : i32
    return %arg0, %c0_i32 : i32, i32
  }
}

</mosaic_0001>

<llo_original>
// kernel: tpu_custom_call.1
$region0: #{tpu_custom_call.1}
  #allocation0 [shape = 'u32[]', space=smem, size = 0x4, offset = 0x4, fixed_abs, tag = 'smem constant byte address 0x4 - core index']
  #allocation1 [shape = 'u32[144,128]{1,0:T(1,128)}', space=vmem, size = 0x12000, scoped, tag = 'internal scratch']
  %s0 = inlined_call_operand.hbm [shape: f32[16,128], index: 0, kind: input, shape index: {}]
  %s1 = inlined_call_operand.vmem [shape: f32[1,128], index: 1, kind: input, shape index: {}]
  %s2 = inlined_call_operand.vmem [shape: f32[1,128], index: 2, kind: input, shape index: {}]
  %s3 = inlined_call_operand.hbm [shape: f32[128,256], index: 3, kind: input, shape index: {}]
  %s4 = inlined_call_operand.vmem [shape: f32[1,256], index: 4, kind: input, shape index: {}]
  %s5 = inlined_call_operand.hbm [shape: f32[256,128], index: 5, kind: input, shape index: {}]
  %s6 = inlined_call_operand.vmem [shape: f32[1,128], index: 6, kind: input, shape index: {}]
  %s7 = inlined_call_operand.hbm [shape: f32[16,128], index: 7, kind: output, shape index: {}]
  %s8 = sld [smem:[#allocation0]]
  $region50: #{tpu_custom_call.1} parent=0
    _
  %s10 = ssub.s32 1, %s8
  %s11 = scalar_select 0, %s10, %s8
  $region1: #{tpu_custom_call.1} parent=0
    #allocation2 [shape = 'u8[8192]{0}', space=vmem, size = 0x2000, scoped, tag = 'input window, operand 0, single buffered']
    #allocation3 [shape = 's32[1]{0}', space=sflag, size = 0x4, scoped, tag = 'scoped memory for tpu_custom_call.1']
    #allocation4 [shape = 's32[1]{0}', space=sflag, size = 0x4, scoped, tag = 'scoped memory for tpu_custom_call.1']
    #allocation5 [shape = 'u8[131072]{0}', space=vmem, size = 0x20000, scoped, tag = 'input window, operand 3, single buffered']
    #allocation6 [shape = 's32[1]{0}', space=sflag, size = 0x4, scoped, tag = 'scoped memory for tpu_custom_call.1']
    #allocation7 [shape = 'u8[131072]{0}', space=vmem, size = 0x20000, scoped, tag = 'input window, operand 5, single buffered']
    #allocation8 [shape = 'u8[8192]{0}', space=vmem, size = 0x2000, scoped, tag = 'output window, operand 0, single buffered']
    %12 = vsyncpa [#allocation3], 0
    %13 = vsyncpa [#allocation6], 0
    %14 = vsyncpa [#allocation4], 0
    // Predicated region
    $region2: #{tpu_custom_call.1} parent=1 // pred_check
      _
    $region3: #{tpu_custom_call.1} parent=1 // pred_check_branch
      %16 = sbr.rel (0) target = $region5
    $region4: #{tpu_custom_call.1} parent=1 // pred_region
      %s18 = ssub.s32 256, 256
      %19 = vsyncadd [#allocation3], %s18
      %s20 = sshll.u32 [#allocation2], 4
      %s21 = int_to_ptr.vmem [resolvable:$true] %s20
      %26 = dma.hbm_to_vmem [thread:$0]  %s0, 256, %s21, [#allocation3], 128, 128, 8
    $region5: #{tpu_custom_call.1} parent=1 // pred_fallthru
      _
    // Predicated region
    $region6: #{tpu_custom_call.1} parent=1 // pred_check
      _
    $region7: #{tpu_custom_call.1} parent=1 // pred_check_branch
      %28 = sbr.rel (0) target = $region9
    $region8: #{tpu_custom_call.1} parent=1 // pred_region
      _
    $region9: #{tpu_custom_call.1} parent=1 // pred_fallthru
      _
    // Predicated region
    $region10: #{tpu_custom_call.1} parent=1 // pred_check
      _
    $region11: #{tpu_custom_call.1} parent=1 // pred_check_branch
      %30 = sbr.rel (0) target = $region13
    $region12: #{tpu_custom_call.1} parent=1 // pred_region
      _
    $region13: #{tpu_custom_call.1} parent=1 // pred_fallthru
      _
    // Predicated region
    $region14: #{tpu_custom_call.1} parent=1 // pred_check
      _
    $region15: #{tpu_custom_call.1} parent=1 // pred_check_branch
      %32 = sbr.rel (0) target = $region17
    $region16: #{tpu_custom_call.1} parent=1 // pred_region
      %s34 = ssub.s32 4096, 4096
      %35 = vsyncadd [#allocation6], %s34
      %s36 = sshll.u32 [#allocation5], 4
      %s37 = int_to_ptr.vmem [resolvable:$true] %s36
      %42 = dma.hbm_to_vmem [thread:$0]  %s3, 4096, %s37, [#allocation6], 256, 256, 16
    $region17: #{tpu_custom_call.1} parent=1 // pred_fallthru
      _
    // Predicated region
    $region18: #{tpu_custom_call.1} parent=1 // pred_check
      _
    $region19: #{tpu_custom_call.1} parent=1 // pred_check_branch
      %44 = sbr.rel (0) target = $region21
    $region20: #{tpu_custom_call.1} parent=1 // pred_region
      _
    $region21: #{tpu_custom_call.1} parent=1 // pred_fallthru
      _
    // Predicated region
    $region22: #{tpu_custom_call.1} parent=1 // pred_check
      _
    $region23: #{tpu_custom_call.1} parent=1 // pred_check_branch
      %46 = sbr.rel (0) target = $region25
    $region24: #{tpu_custom_call.1} parent=1 // pred_region
      %s48 = ssub.s32 4096, 4096
      %49 = vsyncadd [#allocation6], %s48
      %s50 = sshll.u32 [#allocation7], 4
      %s51 = int_to_ptr.vmem [resolvable:$true] %s50
      %56 = dma.hbm_to_vmem [thread:$0]  %s5, 4096, %s51, [#allocation6], 128, 128, 8
    $region25: #{tpu_custom_call.1} parent=1 // pred_fallthru
      _
    // Predicated region
    $region26: #{tpu_custom_call.1} parent=1 // pred_check
      _
    $region27: #{tpu_custom_call.1} parent=1 // pred_check_branch
      %58 = sbr.rel (0) target = $region29
    $region28: #{tpu_custom_call.1} parent=1 // pred_region
      _
    $region29: #{tpu_custom_call.1} parent=1 // pred_fallthru
      _
    // Predicated region
    $region30: #{tpu_custom_call.1} parent=1 // pred_check
      _
    $region31: #{tpu_custom_call.1} parent=1 // pred_check_branch
      %60 = sbr.rel (0) target = $region33
    $region32: #{tpu_custom_call.1} parent=1 // pred_region
      %61 = dma.done [#allocation3], 256
    $region33: #{tpu_custom_call.1} parent=1 // pred_fallthru
      _
    // Predicated region
    $region34: #{tpu_custom_call.1} parent=1 // pred_check
      _
    $region35: #{tpu_custom_call.1} parent=1 // pred_check_branch
      %63 = sbr.rel (0) target = $region37
    $region36: #{tpu_custom_call.1} parent=1 // pred_region
      %64 = dma.done [#allocation6], 4096
    $region37: #{tpu_custom_call.1} parent=1 // pred_fallthru
      _
    // Predicated region
    $region38: #{tpu_custom_call.1} parent=1 // pred_check
      _
    $region39: #{tpu_custom_call.1} parent=1 // pred_check_branch
      %66 = sbr.rel (0) target = $region41
    $region40: #{tpu_custom_call.1} parent=1 // pred_region
      %67 = dma.done [#allocation6], 4096
    $region41: #{tpu_custom_call.1} parent=1 // pred_fallthru
      _
    %v68 = vld [vmem:[#allocation2] sm:$0xff]
    %v69 = vld [vmem:[#allocation2 + $0x8] sm:$0xff]
    %70 = vadd.xlane.f32.xlu0 %v68
    %v71 = vpop.xlane.xlu0 %70
    %72 = vadd.xlane.f32.xlu0 %v69
    %v73 = vpop.xlane.xlu0 %72
    %v74 = vrcp.pop 128.0
    %v75 = vmul.f32 %v71, %v74
    %v76 = vmul.f32 %v73, %v74
    %v77 = vsub.f32 %v68, %v75
    %v78 = vsub.f32 %v69, %v76
    %v79 = vmul.f32 %v77, %v77
    %v80 = vmul.f32 %v78, %v78
    %81 = vadd.xlane.f32.xlu0 %v79
    %v82 = vpop.xlane.xlu0 %81
    %83 = vadd.xlane.f32.xlu0 %v80
    %v84 = vpop.xlane.xlu0 %83
    %v85 = vmul.f32 %v82, %v74
    %v86 = vmul.f32 %v84, %v74
    %v87 = vadd.f32 %v85, 1e-05
    %v88 = vadd.f32 %v86, 1e-05
    %v89 = vrsqrt.pop %v87
    %v90 = vrsqrt.pop %v88
    %v91 = vmul.f32 %v77, %v89
    %v92 = vmul.f32 %v78, %v90
    %v93 = vld [vmem:[%s1] sm:$0x1]
    %v95 = vlaneseq
    %v96 = vshrl.u32 %v95, 7
    %v97 = vsub.s32 0, %v96
    %v98 = vrot.slane %v93, %v97
    %v100 = vmul.f32 %v91, %v98
    %v101 = vmul.f32 %v92, %v98
    %v102 = vld [vmem:[%s2] sm:$0x1]
    %v104 = vlaneseq
    %v105 = vshrl.u32 %v104, 7
    %v106 = vsub.s32 0, %v105
    %v107 = vrot.slane %v102, %v106
    %v109 = vadd.f32 %v100, %v107
    %v110 = vadd.f32 %v101, %v107
    %v111 = vld [vmem:[#allocation5] sm:$0xff]
    %v112 = vld [vmem:[#allocation5 + $0x8] sm:$0xff]
    %v113 = vld [vmem:[#allocation5 + $0x10] sm:$0xff]
    %v114 = vld [vmem:[#allocation5 + $0x18] sm:$0xff]
    %v115 = vld [vmem:[#allocation5 + $0x20] sm:$0xff]
    %v116 = vld [vmem:[#allocation5 + $0x28] sm:$0xff]
    %v117 = vld [vmem:[#allocation5 + $0x30] sm:$0xff]
    %v118 = vld [vmem:[#allocation5 + $0x38] sm:$0xff]
    %v119 = vld [vmem:[#allocation5 + $0x40] sm:$0xff]
    %v120 = vld [vmem:[#allocation5 + $0x48] sm:$0xff]
    %v121 = vld [vmem:[#allocation5 + $0x50] sm:$0xff]
    %v122 = vld [vmem:[#allocation5 + $0x58] sm:$0xff]
    %v123 = vld [vmem:[#allocation5 + $0x60] sm:$0xff]
    %v124 = vld [vmem:[#allocation5 + $0x68] sm:$0xff]
    %v125 = vld [vmem:[#allocation5 + $0x70] sm:$0xff]
    %v126 = vld [vmem:[#allocation5 + $0x78] sm:$0xff]
    %v127 = vld [vmem:[#allocation5 + $0x80] sm:$0xff]
    %v128 = vld [vmem:[#allocation5 + $0x88] sm:$0xff]
    %v129 = vld [vmem:[#allocation5 + $0x90] sm:$0xff]
    %v130 = vld [vmem:[#allocation5 + $0x98] sm:$0xff]
    %v131 = vld [vmem:[#allocation5 + $0xa0] sm:$0xff]
    %v132 = vld [vmem:[#allocation5 + $0xa8] sm:$0xff]
    %v133 = vld [vmem:[#allocation5 + $0xb0] sm:$0xff]
    %v134 = vld [vmem:[#allocation5 + $0xb8] sm:$0xff]
    %v135 = vld [vmem:[#allocation5 + $0xc0] sm:$0xff]
    %v136 = vld [vmem:[#allocation5 + $0xc8] sm:$0xff]
    %v137 = vld [vmem:[#allocation5 + $0xd0] sm:$0xff]
    %v138 = vld [vmem:[#allocation5 + $0xd8] sm:$0xff]
    %v139 = vld [vmem:[#allocation5 + $0xe0] sm:$0xff]
    %v140 = vld [vmem:[#allocation5 + $0xe8] sm:$0xff]
    %v141 = vld [vmem:[#allocation5 + $0xf0] sm:$0xff]
    %v142 = vld [vmem:[#allocation5 + $0xf8] sm:$0xff]
    %v143 = vld [vmem:[%s4] sm:$0x3]
    %v145 = vlaneseq
    %v146 = vshrl.u32 %v145, 7
    %v147 = vsub.s32 0, %v146
    %v148 = vrot.slane %v143, %v147
    %v149 = vlaneseq
    %v150 = vshrl.u32 %v149, 7
    %v151 = vsub.s32 1, %v150
    %v152 = vrot.slane %v143, %v151
    %155 = vmatprep.subr.mxu0 %v112
    %156 = vmatpush1.msra.mxu0 %v111
    %157 = vmatprep.subr.mxu0 %v114
    %158 = vmatpush1.msra.mxu0 %v113
    %159 = vmatprep.subr.mxu0 %v116
    %160 = vmatpush1.msra.mxu0 %v115
    %161 = vmatprep.subr.mxu0 %v118
    %162 = vmatpush1.msra.mxu0 %v117
    %163 = vmatprep.subr.mxu0 %v120
    %164 = vmatpush1.msra.mxu0 %v119
    %165 = vmatprep.subr.mxu0 %v122
    %166 = vmatpush1.msra.mxu0 %v121
    %167 = vmatprep.subr.mxu0 %v124
    %168 = vmatpush1.msra.mxu0 %v123
    %169 = vmatprep.subr.mxu0 %v126
    %170 = vmatpush1.msra.mxu0 %v125
    %171 = vmatprep.subr.mxu0 %v128
    %172 = vmatpush1.msra.mxu0 %v127
    %173 = vmatprep.subr.mxu0 %v130
    %174 = vmatpush1.msra.mxu0 %v129
    %175 = vmatprep.subr.mxu0 %v132
    %176 = vmatpush1.msra.mxu0 %v131
    %177 = vmatprep.subr.mxu0 %v134
    %178 = vmatpush1.msra.mxu0 %v133
    %179 = vmatprep.subr.mxu0 %v136
    %180 = vmatpush1.msra.mxu0 %v135
    %181 = vmatprep.subr.mxu0 %v138
    %182 = vmatpush1.msra.mxu0 %v137
    %183 = vmatprep.subr.mxu0 %v140
    %184 = vmatpush1.msra.mxu0 %v139
    %185 = vmatprep.subr.mxu0 %v142
    %186 = vmatpush1.msra.mxu0 %v141
    %187 = vmatprep.subr.mxu0 0.0
    %188 = vmatpush1.msra.mxu0 0.0
    %189 = vmatprep.subr.mxu0 0.0
    %190 = vmatpush1.msra.mxu0 0.0
    %191 = vmatprep.subr.mxu0 0.0
    %192 = vmatpush1.msra.mxu0 0.0
    %193 = vmatprep.subr.mxu0 0.0
    %194 = vmatpush1.msra.mxu0 0.0
    %195 = vmatprep.subr.mxu0 0.0
    %196 = vmatpush1.msra.mxu0 0.0
    %197 = vmatprep.subr.mxu0 0.0
    %198 = vmatpush1.msra.mxu0 0.0
    %199 = vmatprep.subr.mxu0 0.0
    %200 = vmatpush1.msra.mxu0 0.0
    %201 = vmatprep.subr.mxu0 0.0
    %202 = vmatpush1.msra.mxu0 0.0
    %203 = vmatprep.subr.mxu0 0.0
    %204 = vmatpush1.msra.mxu0 0.0
    %205 = vmatprep.subr.mxu0 0.0
    %206 = vmatpush1.msra.mxu0 0.0
    %207 = vmatprep.subr.mxu0 0.0
    %208 = vmatpush1.msra.mxu0 0.0
    %209 = vmatprep.subr.mxu0 0.0
    %210 = vmatpush1.msra.mxu0 0.0
    %211 = vmatprep.subr.mxu0 0.0
    %212 = vmatpush1.msra.mxu0 0.0
    %213 = vmatprep.subr.mxu0 0.0
    %214 = vmatpush1.msra.mxu0 0.0
    %215 = vmatprep.subr.mxu0 0.0
    %216 = vmatpush1.msra.mxu0 0.0
    %217 = vmatprep.subr.mxu0 0.0
    %218 = vmatpush1.msra.mxu0 0.0
    %219 = vmatprep.mubr.f32.mxu0 0.0
    %220 = vmatmul.mubr.f32.gmra.mrb[0].mxu0 %v109
    %v221 = vpop.f32.mrb[0].mxu0
    %v222 = vadd.f32 %v148, %v221
    %v223 = vpop.f32.mrb[0].mxu0
    %v224 = vadd.f32 %v152, %v223
    %225 = vmatprep.mubr.f32.mxu0 0.0
    %226 = vmatmul.mubr.f32.gmra.mrb[0].mxu0 %v110
    %v227 = vpop.f32.mrb[0].mxu0
    %v228 = vadd.f32 %v148, %v227
    %v229 = vpop.f32.mrb[0].mxu0
    %v230 = vadd.f32 %v152, %v229
    %231 = vdwg.mxu0
    %v232 = vmul.f32 %v222, 0.5
    %v233 = vmul.f32 %v224, 0.5
    %v234 = vmul.f32 %v228, 0.5
    %v235 = vmul.f32 %v230, 0.5
    %v236 = vmul.f32 %v222, 0.70710677
    %v237 = vmul.f32 %v224, 0.70710677
    %v238 = vmul.f32 %v228, 0.70710677
    %v239 = vmul.f32 %v230, 0.70710677
    %v240 = verf.f32.pop %v236
    %v241 = verf.f32.pop %v237
    %v242 = verf.f32.pop %v238
    %v243 = verf.f32.pop %v239
    %v244 = vadd.f32 %v240, 1.0
    %v245 = vadd.f32 %v241, 1.0
    %v246 = vadd.f32 %v242, 1.0
    %v247 = vadd.f32 %v243, 1.0
    %v248 = vmul.f32 %v232, %v244
    %v249 = vmul.f32 %v233, %v245
    %v250 = vmul.f32 %v234, %v246
    %v251 = vmul.f32 %v235, %v247
    %v252 = vld [vmem:[#allocation7] sm:$0xff]
    %v253 = vld [vmem:[#allocation7 + $0x8] sm:$0xff]
    %v254 = vld [vmem:[#allocation7 + $0x10] sm:$0xff]
    %v255 = vld [vmem:[#allocation7 + $0x18] sm:$0xff]
    %v256 = vld [vmem:[#allocation7 + $0x20] sm:$0xff]
    %v257 = vld [vmem:[#allocation7 + $0x28] sm:$0xff]
    %v258 = vld [vmem:[#allocation7 + $0x30] sm:$0xff]
    %v259 = vld [vmem:[#allocation7 + $0x38] sm:$0xff]
    %v260 = vld [vmem:[#allocation7 + $0x40] sm:$0xff]
    %v261 = vld [vmem:[#allocation7 + $0x48] sm:$0xff]
    %v262 = vld [vmem:[#allocation7 + $0x50] sm:$0xff]
    %v263 = vld [vmem:[#allocation7 + $0x58] sm:$0xff]
    %v264 = vld [vmem:[#allocation7 + $0x60] sm:$0xff]
    %v265 = vld [vmem:[#allocation7 + $0x68] sm:$0xff]
    %v266 = vld [vmem:[#allocation7 + $0x70] sm:$0xff]
    %v267 = vld [vmem:[#allocation7 + $0x78] sm:$0xff]
    %v268 = vld [vmem:[#allocation7 + $0x80] sm:$0xff]
    %v269 = vld [vmem:[#allocation7 + $0x88] sm:$0xff]
    %v270 = vld [vmem:[#allocation7 + $0x90] sm:$0xff]
    %v271 = vld [vmem:[#allocation7 + $0x98] sm:$0xff]
    %v272 = vld [vmem:[#allocation7 + $0xa0] sm:$0xff]
    %v273 = vld [vmem:[#allocation7 + $0xa8] sm:$0xff]
    %v274 = vld [vmem:[#allocation7 + $0xb0] sm:$0xff]
    %v275 = vld [vmem:[#allocation7 + $0xb8] sm:$0xff]
    %v276 = vld [vmem:[#allocation7 + $0xc0] sm:$0xff]
    %v277 = vld [vmem:[#allocation7 + $0xc8] sm:$0xff]
    %v278 = vld [vmem:[#allocation7 + $0xd0] sm:$0xff]
    %v279 = vld [vmem:[#allocation7 + $0xd8] sm:$0xff]
    %v280 = vld [vmem:[#allocation7 + $0xe0] sm:$0xff]
    %v281 = vld [vmem:[#allocation7 + $0xe8] sm:$0xff]
    %v282 = vld [vmem:[#allocation7 + $0xf0] sm:$0xff]
    %v283 = vld [vmem:[#allocation7 + $0xf8] sm:$0xff]
    %v284 = vld [vmem:[%s6] sm:$0x1]
    %v286 = vlaneseq
    %v287 = vshrl.u32 %v286, 7
    %v288 = vsub.s32 0, %v287
    %v289 = vrot.slane %v284, %v288
    %291 = vmatprep.subr.mxu0 0.0
    %292 = vmatpush1.msra.mxu0 %v252
    %293 = vmatprep.subr.mxu0 0.0
    %294 = vmatpush1.msra.mxu0 %v253
    %295 = vmatprep.subr.mxu0 0.0
    %296 = vmatpush1.msra.mxu0 %v254
    %297 = vmatprep.subr.mxu0 0.0
    %298 = vmatpush1.msra.mxu0 %v255
    %299 = vmatprep.subr.mxu0 0.0
    %300 = vmatpush1.msra.mxu0 %v256
    %301 = vmatprep.subr.mxu0 0.0
    %302 = vmatpush1.msra.mxu0 %v257
    %303 = vmatprep.subr.mxu0 0.0
    %304 = vmatpush1.msra.mxu0 %v258
    %305 = vmatprep.subr.mxu0 0.0
    %306 = vmatpush1.msra.mxu0 %v259
    %307 = vmatprep.subr.mxu0 0.0
    %308 = vmatpush1.msra.mxu0 %v260
    %309 = vmatprep.subr.mxu0 0.0
    %310 = vmatpush1.msra.mxu0 %v261
    %311 = vmatprep.subr.mxu0 0.0
    %312 = vmatpush1.msra.mxu0 %v262
    %313 = vmatprep.subr.mxu0 0.0
    %314 = vmatpush1.msra.mxu0 %v263
    %315 = vmatprep.subr.mxu0 0.0
    %316 = vmatpush1.msra.mxu0 %v264
    %317 = vmatprep.subr.mxu0 0.0
    %318 = vmatpush1.msra.mxu0 %v265
    %319 = vmatprep.subr.mxu0 0.0
    %320 = vmatpush1.msra.mxu0 %v266
    %321 = vmatprep.subr.mxu0 0.0
    %322 = vmatpush1.msra.mxu0 %v267
    %323 = vmatprep.subr.mxu0 0.0
    %324 = vmatpush1.msra.mxu0 %v268
    %325 = vmatprep.subr.mxu0 0.0
    %326 = vmatpush1.msra.mxu0 %v269
    %327 = vmatprep.subr.mxu0 0.0
    %328 = vmatpush1.msra.mxu0 %v270
    %329 = vmatprep.subr.mxu0 0.0
    %330 = vmatpush1.msra.mxu0 %v271
    %331 = vmatprep.subr.mxu0 0.0
    %332 = vmatpush1.msra.mxu0 %v272
    %333 = vmatprep.subr.mxu0 0.0
    %334 = vmatpush1.msra.mxu0 %v273
    %335 = vmatprep.subr.mxu0 0.0
    %336 = vmatpush1.msra.mxu0 %v274
    %337 = vmatprep.subr.mxu0 0.0
    %338 = vmatpush1.msra.mxu0 %v275
    %339 = vmatprep.subr.mxu0 0.0
    %340 = vmatpush1.msra.mxu0 %v276
    %341 = vmatprep.subr.mxu0 0.0
    %342 = vmatpush1.msra.mxu0 %v277
    %343 = vmatprep.subr.mxu0 0.0
    %344 = vmatpush1.msra.mxu0 %v278
    %345 = vmatprep.subr.mxu0 0.0
    %346 = vmatpush1.msra.mxu0 %v279
    %347 = vmatprep.subr.mxu0 0.0
    %348 = vmatpush1.msra.mxu0 %v280
    %349 = vmatprep.subr.mxu0 0.0
    %350 = vmatpush1.msra.mxu0 %v281
    %351 = vmatprep.subr.mxu0 0.0
    %352 = vmatpush1.msra.mxu0 %v282
    %353 = vmatprep.subr.mxu0 0.0
    %354 = vmatpush1.msra.mxu0 %v283
    %355 = vmatprep.mubr.f32.mxu0 %v249
    %356 = vmatmul.mubr.f32.gmra.mrb[0].mxu0 %v248
    %v357 = vpop.f32.mrb[0].mxu0
    %v358 = vadd.f32 %v289, %v357
    %v359 = vpop.f32.mrb[0].mxu0
    %360 = vmatprep.mubr.f32.mxu0 %v251
    %361 = vmatmul.mubr.f32.gmra.mrb[0].mxu0 %v250
    %v362 = vpop.f32.mrb[0].mxu0
    %v363 = vadd.f32 %v289, %v362
    %v364 = vpop.f32.mrb[0].mxu0
    %365 = vdwg.mxu0
    %366 = vst [vmem:[#allocation8] sm:$0xff] %v358
    %367 = vst [vmem:[#allocation8 + $0x8] sm:$0xff] %v363
    // Predicated region
    $region42: #{tpu_custom_call.1} parent=1 // pred_check
      _
    $region43: #{tpu_custom_call.1} parent=1 // pred_check_branch
      %369 = sbr.rel (0) target = $region45
    $region44: #{tpu_custom_call.1} parent=1 // pred_region
      %s371 = ssub.s32 256, 256
      %372 = vsyncadd [#allocation4], %s371
      %s373 = sshll.u32 [#allocation8], 4
      %s374 = int_to_ptr.vmem [resolvable:$true] %s373
      %379 = dma.vmem_to_hbm [thread:$0]  %s374, 256, %s7, [#allocation4], 128, 128, 8
    $region45: #{tpu_custom_call.1} parent=1 // pred_fallthru
      _
    // Predicated region
    $region46: #{tpu_custom_call.1} parent=1 // pred_check
      _
    $region47: #{tpu_custom_call.1} parent=1 // pred_check_branch
      %381 = sbr.rel (0) target = $region49
    $region48: #{tpu_custom_call.1} parent=1 // pred_region
      %382 = dma.done [#allocation4], 256
    $region49: #{tpu_custom_call.1} parent=1 // pred_fallthru
      _
    %383 = vsyncpa [#allocation3], 1
    %384 = vsyncpa [#allocation6], 1
    %385 = vsyncpa [#allocation4], 1

</llo_original>
